<compile_context>
chip_gen: v6e
topology: v6e:2x2x1
jax: 0.10.0
libtpu: 0.0.40
codegen_flags: <defaults>
</compile_context>

<pallas_src>
import jax
import jax.numpy as jnp
from jax.experimental import pallas as pl
from jax.experimental.pallas import tpu as pltpu


def _attention_kernel(x_ref, w1_ref, b1_ref, wa1_ref, ba1_ref, wa2r_ref, ba2_ref,
                      wcr_ref, bc_ref, yprob_ref, a_ref):
    # x_ref: (N, D) for the current bag (leading bag dim squeezed by the BlockSpec).
    cd = w1_ref.dtype                                   # MXU operand dtype (f32 or bf16)
    x = x_ref[...]

    # embedding_proj: Linear(D, M) + ReLU   (MXU, f32 accumulation)
    h = jnp.dot(x, w1_ref[...], preferred_element_type=jnp.float32) + b1_ref[...]
    h = jnp.maximum(h, 0.0)                             # (N, M) f32

    # attention hidden: Linear(M, L) + Tanh  (MXU + EUP)
    t = jnp.tanh(jnp.dot(h.astype(cd), wa1_ref[...],
                         preferred_element_type=jnp.float32) + ba1_ref[...])   # (N, L) f32

    # attention logits: Linear(L, 1) as VPU multiply + lane reduction -> (N, 1)
    logits = jnp.sum(t * wa2r_ref[...], axis=-1, keepdims=True) + ba2_ref[...]

    # softmax over instances (sublane axis); EXACT reciprocal (approx=True was the source
    # of the correctness failure).
    m = jnp.max(logits, axis=0, keepdims=True)
    e = jnp.exp(logits - m)
    a_col = e / jnp.sum(e, axis=0, keepdims=True)       # (N, 1)

    a_ref[...] = jnp.transpose(a_col, (1, 0))           # A row: (1, N)

    # attention pooling Z = A @ H as VPU multiply + sublane reduction -> (1, M)
    z = jnp.sum(a_col * h, axis=0, keepdims=True)

    # classifier: Linear(M, 1) + Sigmoid (VPU reduce + exact EUP exp / divide)
    logit = jnp.sum(z * wcr_ref[...], axis=-1, keepdims=True) + bc_ref[...]    # (1, 1)
    yprob_ref[...] = 1.0 / (1.0 + jnp.exp(-logit))


def attention_forward(x, params, compute_dtype=jnp.float32):
    """x: (num_bags, N, D). The PyTorch module's forward is the num_bags == 1 case
    (x.squeeze(0)). Returns (Y_prob (G,1), Y_hat (G,1), A (G,N))."""
    G, N, D = x.shape
    w1, b1, wa1, ba1, wa2, ba2, wc, bc = params
    M = w1.shape[1]
    L = wa1.shape[1]
    B = wa2.shape[1]
    # PyTorch's classifier Linear(M*B, 1) only type-checks for B == 1 (Z is (B, M)).
    assert B == 1, "attention_branches must be 1"

    # Degenerate (out_features == 1) weights are passed as f32 row vectors so the kernel
    # uses VPU reductions instead of tiny MXU matmuls (and avoids the extra transpose).
    wa2_row = jnp.asarray(wa2, jnp.float32).T           # (1, L)
    wc_row = jnp.asarray(wc, jnp.float32).T             # (1, M)

    xin = x.astype(compute_dtype)
    w1c = jnp.asarray(w1, compute_dtype)
    wa1c = jnp.asarray(wa1, compute_dtype)
    b1f = jnp.asarray(b1, jnp.float32)
    ba1f = jnp.asarray(ba1, jnp.float32)
    ba2f = jnp.asarray(ba2, jnp.float32)
    bcf = jnp.asarray(bc, jnp.float32)

    # Weights/biases: same block every grid step -> stay VMEM resident.
    const2d = lambda shape: pl.BlockSpec(shape, lambda g: (0, 0))

    y_prob3, a3 = pl.pallas_call(
        _attention_kernel,
        grid=(G,),
        in_specs=[
            pl.BlockSpec((None, N, D), lambda g: (g, 0, 0)),   # x: one bag per grid step
            const2d((D, M)),                                   # w1
            const2d((1, M)),                                   # b1
            const2d((M, L)),                                   # wa1
            const2d((1, L)),                                   # ba1
            const2d((1, L)),                                   # wa2 row
            const2d((1, 1)),                                   # ba2
            const2d((1, M)),                                   # wc row
            const2d((1, 1)),                                   # bc
        ],
        out_specs=(
            pl.BlockSpec((None, 1, 1), lambda g: (g, 0, 0)),   # Y_prob
            pl.BlockSpec((None, 1, N), lambda g: (g, 0, 0)),   # A
        ),
        out_shape=(
            jax.ShapeDtypeStruct((G, 1, 1), jnp.float32),
            jax.ShapeDtypeStruct((G, 1, N), jnp.float32),
        ),
        compiler_params=pltpu.CompilerParams(
            dimension_semantics=("parallel",),                 # v7x: split bags over 2 TCs
        ),
    )(xin, w1c, b1f, wa1c, ba1f, wa2_row, ba2f, wc_row, bcf)

    y_prob = y_prob3[:, 0, :]                                  # (G, 1)
    a = a3[:, 0, :]                                            # (G, N)
    # Threshold outside the kernel (avoids one masked (1,1) store per bag).
    y_hat = (y_prob >= 0.5).astype(jnp.float32)
    return y_prob, y_hat, a


def init_params(key, input_dim, M, L, branches):
    """Deterministic init mimicking torch.nn.Linear (uniform +/- 1/sqrt(fan_in))."""
    def linear(k, fan_in, fan_out):
        k1, k2 = jax.random.split(k)
        bound = 1.0 / jnp.sqrt(jnp.float32(fan_in))
        w = jax.random.uniform(k1, (fan_in, fan_out), jnp.float32, -bound, bound)
        b = jax.random.uniform(k2, (1, fan_out), jnp.float32, -bound, bound)
        return w, b

    k1, k2, k3, k4 = jax.random.split(key, 4)
    w1, b1 = linear(k1, input_dim, M)
    wa1, ba1 = linear(k2, M, L)
    wa2, ba2 = linear(k3, L, branches)
    wc, bc = linear(k4, M * branches, 1)
    return (w1, b1, wa1, ba1, wa2, ba2, wc, bc)


def reference_forward(x_bag, params):
    """Pure-JAX reference for one (1, N, D) bag, matching the PyTorch semantics."""
    w1, b1, wa1, ba1, wa2, ba2, wc, bc = params
    h = jnp.maximum(x_bag[0] @ w1 + b1, 0.0)
    a_raw = jnp.tanh(h @ wa1 + ba1) @ wa2 + ba2
    a = jax.nn.softmax(a_raw.T, axis=1)
    z = a @ h
    y_prob = jax.nn.sigmoid(z @ wc + bc)
    y_hat = (y_prob >= 0.5).astype(jnp.float32)
    return y_prob, y_hat, a


if __name__ == "__main__":
    N, INPUT_DIM, M, L, BRANCHES = 8, 32, 64, 32, 1
    NUM_BAGS = 4

    key = jax.random.PRNGKey(0)
    kx, kxb, kp = jax.random.split(key, 3)
    params = init_params(kp, INPUT_DIM, M, L, BRANCHES)

    # --- single bag: exactly the PyTorch module's forward (x of shape (1, N, D)) ---
    x1 = jax.random.normal(kx, (1, N, INPUT_DIM), jnp.float32)
    y_prob, y_hat, a = attention_forward(x1, params)
    jax.block_until_ready((y_prob, y_hat, a))

    ry_prob, ry_hat, ra = reference_forward(x1, params)
    assert jnp.allclose(y_prob, ry_prob, atol=1e-3), (y_prob, ry_prob)
    assert jnp.allclose(a, ra, atol=1e-3), (a, ra)
    assert bool(jnp.all(y_hat == ry_hat) | jnp.any(jnp.abs(ry_prob - 0.5) < 1e-3))

    # --- batched bags: one pallas_call with grid=(NUM_BAGS,) (main throughput lever) ---
    xb = jax.random.normal(kxb, (NUM_BAGS, N, INPUT_DIM), jnp.float32)
    yb, yhb, ab = attention_forward(xb, params)
    jax.block_until_ready((yb, yhb, ab))
    for g in range(NUM_BAGS):
        rp, rh, raa = reference_forward(xb[g:g + 1], params)
        assert jnp.allclose(yb[g:g + 1], rp, atol=1e-3), (g, yb[g], rp)
        assert jnp.allclose(ab[g:g + 1], raa, atol=1e-3), (g, ab[g], raa)

    # --- bf16 MXU operands (v6e/v7x HBM-traffic optimization); loose sanity check ---
    yb16, _, ab16 = attention_forward(xb, params, compute_dtype=jnp.bfloat16)
    jax.block_until_ready((yb16, ab16))
    assert jnp.allclose(yb16, yb, atol=0.1) and jnp.allclose(ab16, ab, atol=0.1)

    print("KERNEL_OK")
</pallas_src>

<mosaic_0001>
module attributes {stable_mosaic.version = 11 : i64} {
  func.func @_attention_kernel(%arg0: i32, %arg1: memref<1x8x32xf32, #tpu.memory_space<vmem>>, %arg2: memref<32x64xf32, #tpu.memory_space<vmem>>, %arg3: memref<1x64xf32, #tpu.memory_space<vmem>>, %arg4: memref<64x32xf32, #tpu.memory_space<vmem>>, %arg5: memref<1x32xf32, #tpu.memory_space<vmem>>, %arg6: memref<1x32xf32, #tpu.memory_space<vmem>>, %arg7: memref<1x1xf32, #tpu.memory_space<vmem>>, %arg8: memref<1x64xf32, #tpu.memory_space<vmem>>, %arg9: memref<1x1xf32, #tpu.memory_space<vmem>>, %arg10: memref<1x1x1xf32, #tpu.memory_space<vmem>>, %arg11: memref<1x1x8xf32, #tpu.memory_space<vmem>>) attributes {dimension_semantics = [#tpu.dimension_semantics<parallel>], iteration_bounds = array<i64: 1>, scalar_prefetch = 0 : i64, scratch_operands = 0 : i64, tpu.core_type = #tpu.core_type<tc>, window_params = [{transform_indices = @transform_0, window_bounds = array<i64: 1, 8, 32>}, {pipeline_mode = #tpu.pipeline_mode<synchronous>, transform_indices = @transform_1, window_bounds = array<i64: 32, 64>}, {pipeline_mode = #tpu.pipeline_mode<synchronous>, transform_indices = @transform_2, window_bounds = array<i64: 1, 64>}, {pipeline_mode = #tpu.pipeline_mode<synchronous>, transform_indices = @transform_3, window_bounds = array<i64: 64, 32>}, {pipeline_mode = #tpu.pipeline_mode<synchronous>, transform_indices = @transform_4, window_bounds = array<i64: 1, 32>}, {pipeline_mode = #tpu.pipeline_mode<synchronous>, transform_indices = @transform_5, window_bounds = array<i64: 1, 32>}, {pipeline_mode = #tpu.pipeline_mode<synchronous>, transform_indices = @transform_6, window_bounds = array<i64: 1, 1>}, {pipeline_mode = #tpu.pipeline_mode<synchronous>, transform_indices = @transform_7, window_bounds = array<i64: 1, 64>}, {pipeline_mode = #tpu.pipeline_mode<synchronous>, transform_indices = @transform_8, window_bounds = array<i64: 1, 1>}, {transform_indices = @transform_9, window_bounds = array<i64: 1, 1, 1>}, {transform_indices = @transform_10, window_bounds = array<i64: 1, 1, 8>}]} {
    %c0 = arith.constant 0 : index
    %c0_0 = arith.constant 0 : index
    %c0_1 = arith.constant 0 : index
    %0 = vector.load %arg1[%c0, %c0_0, %c0_1] : memref<1x8x32xf32, #tpu.memory_space<vmem>>, vector<1x8x32xf32>
    %1 = vector.shape_cast %0 : vector<1x8x32xf32> to vector<8x32xf32>
    %c0_2 = arith.constant 0 : index
    %c0_3 = arith.constant 0 : index
    %2 = vector.load %arg2[%c0_2, %c0_3] : memref<32x64xf32, #tpu.memory_space<vmem>>, vector<32x64xf32>
    %cst = arith.constant dense<0.000000e+00> : vector<8x64xf32>
    %3 = tpu.matmul %1, %2, %cst {dimension_numbers = #tpu.dot_dimension_numbers<[1], [0], [0], [1], [0, 0, 1, 1], [], []>} : vector<8x32xf32>, vector<32x64xf32>, vector<8x64xf32> -> vector<8x64xf32>
    %c0_4 = arith.constant 0 : index
    %c0_5 = arith.constant 0 : index
    %4 = vector.load %arg3[%c0_4, %c0_5] : memref<1x64xf32, #tpu.memory_space<vmem>>, vector<1x64xf32>
    %5 = vector.broadcast %4 : vector<1x64xf32> to vector<8x64xf32>
    %6 = arith.addf %3, %5 : vector<8x64xf32>
    %cst_6 = arith.constant 0.000000e+00 : f32
    %7 = vector.broadcast %cst_6 : f32 to vector<8x64xf32>
    %8 = arith.maximumf %6, %7 : vector<8x64xf32>
    %c0_7 = arith.constant 0 : index
    %c0_8 = arith.constant 0 : index
    %9 = vector.load %arg4[%c0_7, %c0_8] : memref<64x32xf32, #tpu.memory_space<vmem>>, vector<64x32xf32>
    %cst_9 = arith.constant dense<0.000000e+00> : vector<8x32xf32>
    %10 = tpu.matmul %8, %9, %cst_9 {dimension_numbers = #tpu.dot_dimension_numbers<[1], [0], [0], [1], [0, 0, 1, 1], [], []>} : vector<8x64xf32>, vector<64x32xf32>, vector<8x32xf32> -> vector<8x32xf32>
    %c0_10 = arith.constant 0 : index
    %c0_11 = arith.constant 0 : index
    %11 = vector.load %arg5[%c0_10, %c0_11] : memref<1x32xf32, #tpu.memory_space<vmem>>, vector<1x32xf32>
    %12 = vector.broadcast %11 : vector<1x32xf32> to vector<8x32xf32>
    %13 = arith.addf %10, %12 : vector<8x32xf32>
    %14 = math.tanh %13 : vector<8x32xf32>
    %c0_12 = arith.constant 0 : index
    %c0_13 = arith.constant 0 : index
    %15 = vector.load %arg6[%c0_12, %c0_13] : memref<1x32xf32, #tpu.memory_space<vmem>>, vector<1x32xf32>
    %16 = vector.broadcast %15 : vector<1x32xf32> to vector<8x32xf32>
    %17 = arith.mulf %14, %16 : vector<8x32xf32>
    %cst_14 = arith.constant dense<0.000000e+00> : vector<8xf32>
    %18 = vector.multi_reduction <add>, %17, %cst_14 [1] : vector<8x32xf32> to vector<8xf32>
    %19 = vector.shape_cast %18 : vector<8xf32> to vector<8x1xf32>
    %c0_15 = arith.constant 0 : index
    %c0_16 = arith.constant 0 : index
    %20 = vector.load %arg7[%c0_15, %c0_16] : memref<1x1xf32, #tpu.memory_space<vmem>>, vector<1x1xf32>
    %21 = vector.broadcast %20 : vector<1x1xf32> to vector<8x1xf32>
    %22 = arith.addf %19, %21 : vector<8x1xf32>
    %cst_17 = arith.constant dense<0xFF800000> : vector<1xf32>
    %23 = vector.multi_reduction <maximumf>, %22, %cst_17 [0] : vector<8x1xf32> to vector<1xf32>
    %24 = vector.shape_cast %23 : vector<1xf32> to vector<1x1xf32>
    %25 = vector.broadcast %24 : vector<1x1xf32> to vector<8x1xf32>
    %26 = arith.subf %22, %25 : vector<8x1xf32>
    %27 = math.exp %26 : vector<8x1xf32>
    %cst_18 = arith.constant dense<0.000000e+00> : vector<1xf32>
    %28 = vector.multi_reduction <add>, %27, %cst_18 [0] : vector<8x1xf32> to vector<1xf32>
    %29 = vector.shape_cast %28 : vector<1xf32> to vector<1x1xf32>
    %30 = vector.broadcast %29 : vector<1x1xf32> to vector<8x1xf32>
    %31 = arith.divf %27, %30 : vector<8x1xf32>
    %32 = tpu.transpose %31, [1, 0] : vector<8x1xf32> -> vector<1x8xf32>
    %c0_19 = arith.constant 0 : index
    %c0_20 = arith.constant 0 : index
    %c0_21 = arith.constant 0 : index
    %33 = vector.load %arg11[%c0_19, %c0_20, %c0_21] : memref<1x1x8xf32, #tpu.memory_space<vmem>>, vector<1x1x8xf32>
    %34 = vector.shape_cast %33 : vector<1x1x8xf32> to vector<1x8xf32>
    %35 = vector.shape_cast %32 : vector<1x8xf32> to vector<1x1x8xf32>
    tpu.vector_store %arg11[%c0_19, %c0_20, %c0_21], %35 {strides = array<i32>} : memref<1x1x8xf32, #tpu.memory_space<vmem>>, vector<1x1x8xf32>,
    %36 = vector.broadcast %31 : vector<8x1xf32> to vector<8x64xf32>
    %37 = arith.mulf %36, %8 : vector<8x64xf32>
    %cst_22 = arith.constant dense<0.000000e+00> : vector<64xf32>
    %38 = vector.multi_reduction <add>, %37, %cst_22 [0] : vector<8x64xf32> to vector<64xf32>
    %39 = vector.shape_cast %38 : vector<64xf32> to vector<1x64xf32>
    %c0_23 = arith.constant 0 : index
    %c0_24 = arith.constant 0 : index
    %40 = vector.load %arg8[%c0_23, %c0_24] : memref<1x64xf32, #tpu.memory_space<vmem>>, vector<1x64xf32>
    %41 = arith.mulf %39, %40 : vector<1x64xf32>
    %cst_25 = arith.constant dense<0.000000e+00> : vector<1xf32>
    %42 = vector.multi_reduction <add>, %41, %cst_25 [1] : vector<1x64xf32> to vector<1xf32>
    %43 = vector.shape_cast %42 : vector<1xf32> to vector<1x1xf32>
    %c0_26 = arith.constant 0 : index
    %c0_27 = arith.constant 0 : index
    %44 = vector.load %arg9[%c0_26, %c0_27] : memref<1x1xf32, #tpu.memory_space<vmem>>, vector<1x1xf32>
    %45 = arith.addf %43, %44 : vector<1x1xf32>
    %cst_28 = arith.constant 0.000000e+00 : f32
    %46 = vector.broadcast %cst_28 : f32 to vector<1x1xf32>
    %47 = arith.subf %46, %45 : vector<1x1xf32>
    %48 = math.exp %47 : vector<1x1xf32>
    %cst_29 = arith.constant 1.000000e+00 : f32
    %49 = vector.broadcast %cst_29 : f32 to vector<1x1xf32>
    %50 = arith.addf %49, %48 : vector<1x1xf32>
    %cst_30 = arith.constant 1.000000e+00 : f32
    %51 = vector.broadcast %cst_30 : f32 to vector<1x1xf32>
    %52 = arith.divf %51, %50 : vector<1x1xf32>
    %c0_31 = arith.constant 0 : index
    %c0_32 = arith.constant 0 : index
    %c0_33 = arith.constant 0 : index
    %53 = vector.load %arg10[%c0_31, %c0_32, %c0_33] : memref<1x1x1xf32, #tpu.memory_space<vmem>>, vector<1x1x1xf32>
    %54 = vector.shape_cast %53 : vector<1x1x1xf32> to vector<1x1xf32>
    %55 = vector.shape_cast %52 : vector<1x1xf32> to vector<1x1x1xf32>
    tpu.vector_store %arg10[%c0_31, %c0_32, %c0_33], %55 {strides = array<i32>} : memref<1x1x1xf32, #tpu.memory_space<vmem>>, vector<1x1x1xf32>,
    return
  }
  func.func @transform_0(%arg0: i32) -> (i32, i32, i32) {
    %c0_i32 = arith.constant 0 : i32
    %c0_i32_0 = arith.constant 0 : i32
    %c0_i32_1 = arith.constant 0 : i32
    return %arg0, %c0_i32, %c0_i32_0 : i32, i32, i32
  }
  func.func @transform_1(%arg0: i32) -> (i32, i32) {
    %c0_i32 = arith.constant 0 : i32
    %c0_i32_0 = arith.constant 0 : i32
    %c0_i32_1 = arith.constant 0 : i32
    return %c0_i32, %c0_i32_0 : i32, i32
  }
  func.func @transform_2(%arg0: i32) -> (i32, i32) {
    %c0_i32 = arith.constant 0 : i32
    %c0_i32_0 = arith.constant 0 : i32
    %c0_i32_1 = arith.constant 0 : i32
    return %c0_i32, %c0_i32_0 : i32, i32
  }
  func.func @transform_3(%arg0: i32) -> (i32, i32) {
    %c0_i32 = arith.constant 0 : i32
    %c0_i32_0 = arith.constant 0 : i32
    %c0_i32_1 = arith.constant 0 : i32
    return %c0_i32, %c0_i32_0 : i32, i32
  }
  func.func @transform_4(%arg0: i32) -> (i32, i32) {
    %c0_i32 = arith.constant 0 : i32
    %c0_i32_0 = arith.constant 0 : i32
    %c0_i32_1 = arith.constant 0 : i32
    return %c0_i32, %c0_i32_0 : i32, i32
  }
  func.func @transform_5(%arg0: i32) -> (i32, i32) {
    %c0_i32 = arith.constant 0 : i32
    %c0_i32_0 = arith.constant 0 : i32
    %c0_i32_1 = arith.constant 0 : i32
    return %c0_i32, %c0_i32_0 : i32, i32
  }
  func.func @transform_6(%arg0: i32) -> (i32, i32) {
    %c0_i32 = arith.constant 0 : i32
    %c0_i32_0 = arith.constant 0 : i32
    %c0_i32_1 = arith.constant 0 : i32
    return %c0_i32, %c0_i32_0 : i32, i32
  }
  func.func @transform_7(%arg0: i32) -> (i32, i32) {
    %c0_i32 = arith.constant 0 : i32
    %c0_i32_0 = arith.constant 0 : i32
    %c0_i32_1 = arith.constant 0 : i32
    return %c0_i32, %c0_i32_0 : i32, i32
  }
  func.func @transform_8(%arg0: i32) -> (i32, i32) {
    %c0_i32 = arith.constant 0 : i32
    %c0_i32_0 = arith.constant 0 : i32
    %c0_i32_1 = arith.constant 0 : i32
    return %c0_i32, %c0_i32_0 : i32, i32
  }
  func.func @transform_9(%arg0: i32) -> (i32, i32, i32) {
    %c0_i32 = arith.constant 0 : i32
    %c0_i32_0 = arith.constant 0 : i32
    %c0_i32_1 = arith.constant 0 : i32
    return %arg0, %c0_i32, %c0_i32_0 : i32, i32, i32
  }
  func.func @transform_10(%arg0: i32) -> (i32, i32, i32) {
    %c0_i32 = arith.constant 0 : i32
    %c0_i32_0 = arith.constant 0 : i32
    %c0_i32_1 = arith.constant 0 : i32
    return %arg0, %c0_i32, %c0_i32_0 : i32, i32, i32
  }
}

</mosaic_0001>

<llo_original>
// kernel: tpu_custom_call.1
$region0: #{tpu_custom_call.1}
  #allocation0 [shape = 'u32[]', space=smem, size = 0x4, offset = 0x4, fixed_abs, tag = 'smem constant byte address 0x4 - core index']
  #allocation1 [shape = 'u32[144,128]{1,0:T(1,128)}', space=vmem, size = 0x12000, scoped, tag = 'internal scratch']
  #allocation2 [shape = 'f32[1,1]{1,0:T(1,128)S(1)}', space=vmem, size = 0x200, scoped, tag = 'scoped memory for tpu_custom_call.1']
  #allocation3 [shape = 'f32[1,1]{1,0:T(1,128)S(1)}', space=vmem, size = 0x200, scoped, tag = 'scoped memory for tpu_custom_call.1']
  %s0 = inlined_call_operand.vmem [shape: f32[1,8,32], index: 0, kind: input, shape index: {}]
  %s1 = inlined_call_operand.vmem [shape: f32[32,64], index: 1, kind: input, shape index: {}]
  %s2 = inlined_call_operand.vmem [shape: f32[1,64], index: 2, kind: input, shape index: {}]
  %s3 = inlined_call_operand.vmem [shape: f32[64,32], index: 3, kind: input, shape index: {}]
  %s4 = inlined_call_operand.vmem [shape: f32[1,32], index: 4, kind: input, shape index: {}]
  %s5 = inlined_call_operand.vmem [shape: f32[1,32], index: 5, kind: input, shape index: {}]
  %s6 = inlined_call_operand.<no memory space> [shape: f32[1,1], index: 6, kind: input, shape index: {}]
  %s7 = inlined_call_operand.vmem [shape: f32[1,64], index: 7, kind: input, shape index: {}]
  %s8 = inlined_call_operand.<no memory space> [shape: f32[1,1], index: 8, kind: input, shape index: {}]
  %s9 = inlined_call_operand.hbm [shape: f32[1,1,1], index: 9, kind: output, shape index: {0}]
  %s10 = inlined_call_operand.hbm [shape: f32[1,1,8], index: 10, kind: output, shape index: {1}]
  %11 = xla_tuple %s9, %s10
  %s12 = sld [smem:[#allocation0]]
  $region54: #{tpu_custom_call.1} parent=0
    _
  %s14 = ssub.s32 1, %s12
  %s15 = scalar_select 0, %s14, %s12
  %v16 = vstv %s6
  %17 = vst [vmem:[#allocation2] sm:$0x1] %v16
  %v18 = vstv %s8
  %19 = vst [vmem:[#allocation3] sm:$0x1] %v18
  $region1: #{tpu_custom_call.1} parent=0
    #allocation4 [shape = 'u8[512]{0}', space=vmem, size = 0x400, scoped, tag = 'output window, operand 0, single buffered']
    #allocation5 [shape = 's32[1]{0}', space=sflag, size = 0x4, scoped, tag = 'scoped memory for tpu_custom_call.1']
    #allocation6 [shape = 'u8[512]{0}', space=vmem, size = 0x400, scoped, tag = 'output window, operand 1, single buffered']
    #allocation7 [shape = 's32[1]{0}', space=sflag, size = 0x4, scoped, tag = 'scoped memory for tpu_custom_call.1']
    %20 = vsyncpa [#allocation5], 0
    %21 = vsyncpa [#allocation7], 0
    // Predicated region
    $region2: #{tpu_custom_call.1} parent=1 // pred_check
      _
    $region3: #{tpu_custom_call.1} parent=1 // pred_check_branch
      %23 = sbr.rel (0) target = $region5
    $region4: #{tpu_custom_call.1} parent=1 // pred_region
      _
    $region5: #{tpu_custom_call.1} parent=1 // pred_fallthru
      _
    // Predicated region
    $region6: #{tpu_custom_call.1} parent=1 // pred_check
      _
    $region7: #{tpu_custom_call.1} parent=1 // pred_check_branch
      %25 = sbr.rel (0) target = $region9
    $region8: #{tpu_custom_call.1} parent=1 // pred_region
      _
    $region9: #{tpu_custom_call.1} parent=1 // pred_fallthru
      _
    // Predicated region
    $region10: #{tpu_custom_call.1} parent=1 // pred_check
      _
    $region11: #{tpu_custom_call.1} parent=1 // pred_check_branch
      %27 = sbr.rel (0) target = $region13
    $region12: #{tpu_custom_call.1} parent=1 // pred_region
      _
    $region13: #{tpu_custom_call.1} parent=1 // pred_fallthru
      _
    // Predicated region
    $region14: #{tpu_custom_call.1} parent=1 // pred_check
      _
    $region15: #{tpu_custom_call.1} parent=1 // pred_check_branch
      %29 = sbr.rel (0) target = $region17
    $region16: #{tpu_custom_call.1} parent=1 // pred_region
      _
    $region17: #{tpu_custom_call.1} parent=1 // pred_fallthru
      _
    // Predicated region
    $region18: #{tpu_custom_call.1} parent=1 // pred_check
      _
    $region19: #{tpu_custom_call.1} parent=1 // pred_check_branch
      %31 = sbr.rel (0) target = $region21
    $region20: #{tpu_custom_call.1} parent=1 // pred_region
      _
    $region21: #{tpu_custom_call.1} parent=1 // pred_fallthru
      _
    // Predicated region
    $region22: #{tpu_custom_call.1} parent=1 // pred_check
      _
    $region23: #{tpu_custom_call.1} parent=1 // pred_check_branch
      %33 = sbr.rel (0) target = $region25
    $region24: #{tpu_custom_call.1} parent=1 // pred_region
      _
    $region25: #{tpu_custom_call.1} parent=1 // pred_fallthru
      _
    // Predicated region
    $region26: #{tpu_custom_call.1} parent=1 // pred_check
      _
    $region27: #{tpu_custom_call.1} parent=1 // pred_check_branch
      %35 = sbr.rel (0) target = $region29
    $region28: #{tpu_custom_call.1} parent=1 // pred_region
      _
    $region29: #{tpu_custom_call.1} parent=1 // pred_fallthru
      _
    // Predicated region
    $region30: #{tpu_custom_call.1} parent=1 // pred_check
      _
    $region31: #{tpu_custom_call.1} parent=1 // pred_check_branch
      %37 = sbr.rel (0) target = $region33
    $region32: #{tpu_custom_call.1} parent=1 // pred_region
      _
    $region33: #{tpu_custom_call.1} parent=1 // pred_fallthru
      _
    // Predicated region
    $region34: #{tpu_custom_call.1} parent=1 // pred_check
      _
    $region35: #{tpu_custom_call.1} parent=1 // pred_check_branch
      %39 = sbr.rel (0) target = $region37
    $region36: #{tpu_custom_call.1} parent=1 // pred_region
      _
    $region37: #{tpu_custom_call.1} parent=1 // pred_fallthru
      _
    %v40 = vld [vmem:[%s0] sm:$0xff]
    %v41 = vld [vmem:[%s1] sm:$0xff]
    %v42 = vld [vmem:[%s1 + $0x8] sm:$0xff]
    %v43 = vld [vmem:[%s1 + $0x10] sm:$0xff]
    %v44 = vld [vmem:[%s1 + $0x18] sm:$0xff]
    %v45 = vld [vmem:[%s2] sm:$0x1]
    %v47 = vlaneseq
    %v48 = vshrl.u32 %v47, 7
    %v49 = vsub.s32 0, %v48
    %v50 = vrot.slane %v45, %v49
    %vm52 = vcmask 261120
    %v54 = vsel %vm52, %v40, 0
    %56 = vmatprep.subr.mxu0 0.0
    %57 = vmatpush1.msra.mxu0 0.0
    %58 = vmatprep.subr.mxu0 0.0
    %59 = vmatpush1.msra.mxu0 0.0
    %60 = vmatprep.subr.mxu0 0.0
    %61 = vmatpush1.msra.mxu0 0.0
    %62 = vmatprep.subr.mxu0 0.0
    %63 = vmatpush1.msra.mxu0 0.0
    %64 = vmatprep.subr.mxu0 0.0
    %65 = vmatpush1.msra.mxu0 0.0
    %66 = vmatprep.subr.mxu0 0.0
    %67 = vmatpush1.msra.mxu0 0.0
    %68 = vmatprep.subr.mxu0 0.0
    %69 = vmatpush1.msra.mxu0 0.0
    %70 = vmatprep.subr.mxu0 0.0
    %71 = vmatpush1.msra.mxu0 0.0
    %72 = vmatprep.subr.mxu0 0.0
    %73 = vmatpush1.msra.mxu0 0.0
    %74 = vmatprep.subr.mxu0 0.0
    %75 = vmatpush1.msra.mxu0 0.0
    %76 = vmatprep.subr.mxu0 0.0
    %77 = vmatpush1.msra.mxu0 0.0
    %78 = vmatprep.subr.mxu0 0.0
    %79 = vmatpush1.msra.mxu0 0.0
    %80 = vmatprep.subr.mxu0 0.0
    %81 = vmatpush1.msra.mxu0 %v44
    %82 = vmatprep.subr.mxu0 0.0
    %83 = vmatpush1.msra.mxu0 %v43
    %84 = vmatprep.subr.mxu0 0.0
    %85 = vmatpush1.msra.mxu0 %v42
    %86 = vmatprep.subr.mxu0 0.0
    %87 = vmatpush1.msra.mxu0 %v41
    %88 = vmatprep.subr.mxu0 0.0
    %89 = vmatpush2.msra.mxu0 0.0
    %90 = vmatprep.subr.mxu0 0.0
    %91 = vmatpush2.msra.mxu0 0.0
    %92 = vmatprep.subr.mxu0 0.0
    %93 = vmatpush2.msra.mxu0 0.0
    %94 = vmatprep.subr.mxu0 0.0
    %95 = vmatpush2.msra.mxu0 0.0
    %96 = vmatprep.subr.mxu0 0.0
    %97 = vmatpush2.msra.mxu0 0.0
    %98 = vmatprep.subr.mxu0 0.0
    %99 = vmatpush2.msra.mxu0 0.0
    %100 = vmatprep.subr.mxu0 0.0
    %101 = vmatpush2.msra.mxu0 0.0
    %102 = vmatprep.subr.mxu0 0.0
    %103 = vmatpush2.msra.mxu0 0.0
    %104 = vmatprep.subr.mxu0 0.0
    %105 = vmatpush2.msra.mxu0 0.0
    %106 = vmatprep.subr.mxu0 0.0
    %107 = vmatpush2.msra.mxu0 0.0
    %108 = vmatprep.subr.mxu0 0.0
    %109 = vmatpush2.msra.mxu0 0.0
    %110 = vmatprep.subr.mxu0 0.0
    %111 = vmatpush2.msra.mxu0 0.0
    %112 = vmatprep.subr.mxu0 0.0
    %113 = vmatpush2.msra.mxu0 0.0
    %114 = vmatprep.subr.mxu0 0.0
    %115 = vmatpush2.msra.mxu0 0.0
    %116 = vmatprep.subr.mxu0 0.0
    %117 = vmatpush2.msra.mxu0 0.0
    %118 = vmatprep.subr.mxu0 0.0
    %119 = vmatpush2.msra.mxu0 0.0
    %120 = vmatprep.mubr.f32.mxu0 0.0
    %121 = vmatmul.mubr.f32.gmra.mxu0 %v54
    %v122 = vpop.f32.mrf.mxu0
    %v123 = vadd.f32 %v50, %v122
    %v124 = vpop.f32.mrf.mxu0
    %125 = vdwg.mxu0
    %v126 = vmax.f32 %v123, 0.0
    %v127 = vld [vmem:[%s3] sm:$0xff]
    %v128 = vld [vmem:[%s3 + $0x8] sm:$0xff]
    %v129 = vld [vmem:[%s3 + $0x10] sm:$0xff]
    %v130 = vld [vmem:[%s3 + $0x18] sm:$0xff]
    %v131 = vld [vmem:[%s3 + $0x20] sm:$0xff]
    %v132 = vld [vmem:[%s3 + $0x28] sm:$0xff]
    %v133 = vld [vmem:[%s3 + $0x30] sm:$0xff]
    %v134 = vld [vmem:[%s3 + $0x38] sm:$0xff]
    %v135 = vld [vmem:[%s4] sm:$0x1]
    %v137 = vlaneseq
    %v138 = vshrl.u32 %v137, 7
    %v139 = vsub.s32 0, %v138
    %v140 = vrot.slane %v135, %v139
    %vm142 = vcmask 523264
    %v144 = vsel %vm142, %v126, 0
    %146 = vmatprep.subr.mxu0 0.0
    %147 = vmatpush1.msra.mxu0 0.0
    %148 = vmatprep.subr.mxu0 0.0
    %149 = vmatpush1.msra.mxu0 0.0
    %150 = vmatprep.subr.mxu0 0.0
    %151 = vmatpush1.msra.mxu0 0.0
    %152 = vmatprep.subr.mxu0 0.0
    %153 = vmatpush1.msra.mxu0 0.0
    %154 = vmatprep.subr.mxu0 0.0
    %155 = vmatpush1.msra.mxu0 0.0
    %156 = vmatprep.subr.mxu0 0.0
    %157 = vmatpush1.msra.mxu0 0.0
    %158 = vmatprep.subr.mxu0 0.0
    %159 = vmatpush1.msra.mxu0 0.0
    %160 = vmatprep.subr.mxu0 0.0
    %161 = vmatpush1.msra.mxu0 0.0
    %162 = vmatprep.subr.mxu0 0.0
    %163 = vmatpush1.msra.mxu0 %v134
    %164 = vmatprep.subr.mxu0 0.0
    %165 = vmatpush1.msra.mxu0 %v133
    %166 = vmatprep.subr.mxu0 0.0
    %167 = vmatpush1.msra.mxu0 %v132
    %168 = vmatprep.subr.mxu0 0.0
    %169 = vmatpush1.msra.mxu0 %v131
    %170 = vmatprep.subr.mxu0 0.0
    %171 = vmatpush1.msra.mxu0 %v130
    %172 = vmatprep.subr.mxu0 0.0
    %173 = vmatpush1.msra.mxu0 %v129
    %174 = vmatprep.subr.mxu0 0.0
    %175 = vmatpush1.msra.mxu0 %v128
    %176 = vmatprep.subr.mxu0 0.0
    %177 = vmatpush1.msra.mxu0 %v127
    %178 = vmatprep.subr.mxu0 0.0
    %179 = vmatpush2.msra.mxu0 0.0
    %180 = vmatprep.subr.mxu0 0.0
    %181 = vmatpush2.msra.mxu0 0.0
    %182 = vmatprep.subr.mxu0 0.0
    %183 = vmatpush2.msra.mxu0 0.0
    %184 = vmatprep.subr.mxu0 0.0
    %185 = vmatpush2.msra.mxu0 0.0
    %186 = vmatprep.subr.mxu0 0.0
    %187 = vmatpush2.msra.mxu0 0.0
    %188 = vmatprep.subr.mxu0 0.0
    %189 = vmatpush2.msra.mxu0 0.0
    %190 = vmatprep.subr.mxu0 0.0
    %191 = vmatpush2.msra.mxu0 0.0
    %192 = vmatprep.subr.mxu0 0.0
    %193 = vmatpush2.msra.mxu0 0.0
    %194 = vmatprep.subr.mxu0 0.0
    %195 = vmatpush2.msra.mxu0 0.0
    %196 = vmatprep.subr.mxu0 0.0
    %197 = vmatpush2.msra.mxu0 0.0
    %198 = vmatprep.subr.mxu0 0.0
    %199 = vmatpush2.msra.mxu0 0.0
    %200 = vmatprep.subr.mxu0 0.0
    %201 = vmatpush2.msra.mxu0 0.0
    %202 = vmatprep.subr.mxu0 0.0
    %203 = vmatpush2.msra.mxu0 0.0
    %204 = vmatprep.subr.mxu0 0.0
    %205 = vmatpush2.msra.mxu0 0.0
    %206 = vmatprep.subr.mxu0 0.0
    %207 = vmatpush2.msra.mxu0 0.0
    %208 = vmatprep.subr.mxu0 0.0
    %209 = vmatpush2.msra.mxu0 0.0
    %210 = vmatprep.mubr.f32.mxu0 0.0
    %211 = vmatmul.mubr.f32.gmra.mxu0 %v144
    %v212 = vpop.f32.mrf.mxu0
    %v213 = vadd.f32 %v140, %v212
    %v214 = vpop.f32.mrf.mxu0
    %215 = vdwg.mxu0
    %v216 = vtanh.pop %v213
    %v217 = vld [vmem:[%s5] sm:$0x1]
    %v219 = vlaneseq
    %v220 = vshrl.u32 %v219, 7
    %v221 = vsub.s32 0, %v220
    %v222 = vrot.slane %v217, %v221
    %v224 = vmul.f32 %v216, %v222
    %v225 = vsel %vm52, %v224, 0.0
    %226 = vadd.xlane.f32.xlu0 %v225
    %v227 = vpop.xlane.xlu0 %226
    %v228 = vld [vmem:[#allocation2] sm:$0x1]
    %v230 = vlaneseq
    %v231 = vshrl.u32 %v230, 7
    %v232 = vsub.s32 0, %v231
    %v233 = vrot.slane %v228, %v232
    %v235 = vadd.f32 %v227, %v233
    %vm236 = vcmask 7168
    %v237 = vsel %vm236, %v235, -inf
    %v238 = vrot.slane %v237, 4
    %v239 = vmax.f32 %v237, %v238
    %v240 = vrot.slane %v239, 2
    %v241 = vmax.f32 %v239, %v240
    %v242 = vrot.slane %v241, 1
    %v243 = vmax.f32 %v241, %v242
    %v244 = vsub.f32 %v235, %v243
    %v245 = vmul.f32 %v244, 1.442695
    %v246 = vpow.pop %v245
    %v247 = vsel %vm236, %v246, 0.0
    %v248 = vrot.slane %v247, 4
    %v249 = vadd.f32 %v247, %v248
    %v250 = vrot.slane %v249, 2
    %v251 = vadd.f32 %v249, %v250
    %v252 = vrot.slane %v251, 1
    %v253 = vadd.f32 %v251, %v252
    %v254 = vrcp.pop %v253
    %v255 = vmul.f32 %v246, %v254
    %256 = vxpose.xlu0.b32.start [1/16] %v255, 128
    %257 = vxpose.xlu0.b32.cont [2/16] 0.0, 128
    %258 = vxpose.xlu0.b32.cont [3/16] 0.0, 128
    %259 = vxpose.xlu0.b32.cont [4/16] 0.0, 128
    %260 = vxpose.xlu0.b32.cont [5/16] 0.0, 128
    %261 = vxpose.xlu0.b32.cont [6/16] 0.0, 128
    %262 = vxpose.xlu0.b32.cont [7/16] 0.0, 128
    %263 = vxpose.xlu0.b32.cont [8/16] 0.0, 128
    %264 = vxpose.xlu0.b32.cont [9/16] 0.0, 128
    %265 = vxpose.xlu0.b32.cont [10/16] 0.0, 128
    %266 = vxpose.xlu0.b32.cont [11/16] 0.0, 128
    %267 = vxpose.xlu0.b32.cont [12/16] 0.0, 128
    %268 = vxpose.xlu0.b32.cont [13/16] 0.0, 128
    %269 = vxpose.xlu0.b32.cont [14/16] 0.0, 128
    %270 = vxpose.xlu0.b32.cont [15/16] 0.0, 128
    %271 = vxpose.xlu0.b32.end [16/16] 0.0, 128
    %v272 = vpop.trf.xlu0
    %v273 = vpop.trf.xlu0
    %v274 = vpop.trf.xlu0
    %v275 = vpop.trf.xlu0
    %v276 = vpop.trf.xlu0
    %v277 = vpop.trf.xlu0
    %v278 = vpop.trf.xlu0
    %v279 = vpop.trf.xlu0
    %v280 = vpop.trf.xlu0
    %v281 = vpop.trf.xlu0
    %v282 = vpop.trf.xlu0
    %v283 = vpop.trf.xlu0
    %v284 = vpop.trf.xlu0
    %v285 = vpop.trf.xlu0
    %v286 = vpop.trf.xlu0
    %v287 = vpop.trf.xlu0
    %vm288 = vcmask 57344
    %289 = vst.msk [vmem:[#allocation6] sm:$0x1] %vm288, %v272
    %291 = vset.pattern.permute.xlu0 0
    %292 = vperm.xlu0 %291, %v255
    %v293 = vpop.permute.xlu0 %292
    %v295 = vmul.f32 %v293, %v126
    %v296 = vsel %vm142, %v295, 0.0
    %v297 = vrot.slane %v296, 4
    %v298 = vadd.f32 %v296, %v297
    %v299 = vrot.slane %v298, 2
    %v300 = vadd.f32 %v298, %v299
    %v301 = vrot.slane %v300, 1
    %v302 = vadd.f32 %v300, %v301
    %v303 = vld [vmem:[%s7] sm:$0x1]
    %v304 = vmul.f32 %v302, %v303
    %vm305 = vcmask 516096
    %v306 = vsel %vm305, %v304, 0.0
    %307 = vadd.xlane.f32.xlu0 %v306
    %v308 = vpop.xlane.xlu0 %307
    %v309 = vld [vmem:[#allocation3] sm:$0x1]
    %v310 = vadd.f32 %v308, %v309
    %v311 = vsub.f32 0.0, %v310
    %v312 = vmul.f32 %v311, 1.442695
    %v313 = vpow.pop %v312
    %v314 = vadd.f32 %v313, 1.0
    %v315 = vrcp.pop %v314
    %v316 = vmul.f32 1.0, %v315
    %vm317 = vcmask 0
    %318 = vst.msk [vmem:[#allocation4] sm:$0x1] %vm317, %v316
    // Predicated region
    $region38: #{tpu_custom_call.1} parent=1 // pred_check
      _
    $region39: #{tpu_custom_call.1} parent=1 // pred_check_branch
      %320 = sbr.rel (0) target = $region41
    $region40: #{tpu_custom_call.1} parent=1 // pred_region
      %s322 = ssub.s32 16, 16
      %323 = vsyncadd [#allocation5], %s322
      %s325 = sshll.u32 [#allocation4], 4
      %s326 = int_to_ptr.vmem [resolvable:$true] %s325
      %328 = dma.vmem_to_hbm [thread:$0]  %s326, 16, %s9, [#allocation5]
    $region41: #{tpu_custom_call.1} parent=1 // pred_fallthru
      _
    // Predicated region
    $region42: #{tpu_custom_call.1} parent=1 // pred_check
      _
    $region43: #{tpu_custom_call.1} parent=1 // pred_check_branch
      %330 = sbr.rel (0) target = $region45
    $region44: #{tpu_custom_call.1} parent=1 // pred_region
      %s332 = ssub.s32 16, 16
      %333 = vsyncadd [#allocation7], %s332
      %s335 = sshll.u32 [#allocation6], 4
      %s336 = int_to_ptr.vmem [resolvable:$true] %s335
      %338 = dma.vmem_to_hbm [thread:$0]  %s336, 16, %s10, [#allocation7]
    $region45: #{tpu_custom_call.1} parent=1 // pred_fallthru
      _
    // Predicated region
    $region46: #{tpu_custom_call.1} parent=1 // pred_check
      _
    $region47: #{tpu_custom_call.1} parent=1 // pred_check_branch
      %340 = sbr.rel (0) target = $region49
    $region48: #{tpu_custom_call.1} parent=1 // pred_region
      %341 = dma.done [#allocation5], 16
    $region49: #{tpu_custom_call.1} parent=1 // pred_fallthru
      _
    // Predicated region
    $region50: #{tpu_custom_call.1} parent=1 // pred_check
      _
    $region51: #{tpu_custom_call.1} parent=1 // pred_check_branch
      %343 = sbr.rel (0) target = $region53
    $region52: #{tpu_custom_call.1} parent=1 // pred_region
      %344 = dma.done [#allocation7], 16
    $region53: #{tpu_custom_call.1} parent=1 // pred_fallthru
      _
    %345 = vsyncpa [#allocation5], 1
    %346 = vsyncpa [#allocation7], 1

</llo_original>
